<compile_context>
chip_gen: v7x
topology: tpu7x:2x2x1
jax: 0.10.0
libtpu: 0.0.40
codegen_flags: <defaults>
</compile_context>

<pallas_src>
import functools

import jax
import jax.numpy as jnp
from jax import lax
from jax.experimental import pallas as pl
from jax.experimental.pallas import tpu as pltpu

_INV_SQRT2 = 0.7071067811865476
_LANE = 128


def _round_up(x, m):
    return ((x + m - 1) // m) * m


def _vmem_limit_bytes():
    """Generation-aware scoped-VMEM limit: ~3/4 of physical capacity
    (96 MiB on v5e/v6e's 128 MiB, 48 MiB on v7x's 64 MiB per-TC)."""
    try:
        cap = pltpu.get_tpu_info().vmem_capacity_bytes
        return int(cap) * 3 // 4
    except Exception:  # off-TPU trace / older jax — conservative fallback
        return 48 * 1024 * 1024


def _largest_128_divisor(total, cap):
    """Largest multiple of 128 <= cap that divides `total` (total % 128 == 0)."""
    c = (min(cap, total) // _LANE) * _LANE
    while c > _LANE:
        if total % c == 0:
            return c
        c -= _LANE
    return _LANE


def _gelu_f32(h, approx):
    if approx:
        # tanh approximation — tanh runs on the EUP slot (much cheaper than
        # the erf VALU polynomial). Not bit-parity with nn.GELU() default.
        c = jnp.float32(0.7978845608028654)  # sqrt(2/pi)
        return 0.5 * h * (1.0 + jnp.tanh(c * (h + 0.044715 * h * h * h)))
    # Exact GELU (erf): 0.5 * x * (1 + erf(x / sqrt(2)))  — nn.GELU default.
    return 0.5 * h * (1.0 + lax.erf(h * jnp.float32(_INV_SQRT2)))


def _mlp_kernel_1d(x_ref, w1_ref, b1_ref, w2_ref, b2_ref, o_ref, acc_ref,
                   *, h_chunk, n_chunks, approx_gelu):
    """One row tile, full w2 resident.  Hidden dim chunked so f32 temporaries
    stay bounded to (tm, h_chunk)."""
    acc_ref[...] = jnp.broadcast_to(b2_ref[...], acc_ref.shape)

    def body(c, carry):
        cs = pl.multiple_of(c * h_chunk, h_chunk)
        h = jnp.dot(x_ref[...], w1_ref[:, pl.ds(cs, h_chunk)],
                    preferred_element_type=jnp.float32)
        h = h + b1_ref[:, pl.ds(cs, h_chunk)]
        g = _gelu_f32(h, approx_gelu)
        acc_ref[...] += jnp.dot(g.astype(w2_ref.dtype),
                                w2_ref[pl.ds(cs, h_chunk), :],
                                preferred_element_type=jnp.float32)
        return carry

    lax.fori_loop(0, n_chunks, body, 0)
    o_ref[...] = acc_ref[...].astype(o_ref.dtype)


def _mlp_kernel_2d(x_ref, w1_ref, b1_ref, w2_ref, b2_ref, o_ref, g_ref,
                   *, h_chunk, n_chunks, approx_gelu):
    """One (tm, tn) output tile.  fc1+GELU computed once per row tile
    (j == 0) into a bf16 scratch and reused for every output stripe."""
    @pl.when(pl.program_id(1) == 0)
    def _():
        def body(c, carry):
            cs = pl.multiple_of(c * h_chunk, h_chunk)
            h = jnp.dot(x_ref[...], w1_ref[:, pl.ds(cs, h_chunk)],
                        preferred_element_type=jnp.float32)
            h = h + b1_ref[:, pl.ds(cs, h_chunk)]
            g_ref[:, pl.ds(cs, h_chunk)] = (
                _gelu_f32(h, approx_gelu).astype(g_ref.dtype))
            return carry

        lax.fori_loop(0, n_chunks, body, 0)

    # dropout (p = 0.0) is the identity.
    out = jnp.dot(g_ref[...], w2_ref[...], preferred_element_type=jnp.float32)
    o_ref[...] = (out + b2_ref[...]).astype(o_ref.dtype)


def prepare_mlp_params(w1, b1, w2, b2):
    """Pad weights to 128-lane multiples and cast to bf16 ONCE (hoisted out of
    the per-call path).  Zero padding is numerically exact here."""
    d_in, d_h = w1.shape
    d_out = w2.shape[1]
    d_in_p = _round_up(d_in, _LANE)
    d_h_p = _round_up(d_h, _LANE)
    d_out_p = _round_up(d_out, _LANE)
    w1p = jnp.pad(w1, ((0, d_in_p - d_in), (0, d_h_p - d_h))).astype(jnp.bfloat16)
    b1p = jnp.pad(b1.reshape(1, -1), ((0, 0), (0, d_h_p - d_h))).astype(jnp.float32)
    w2p = jnp.pad(w2, ((0, d_h_p - d_h), (0, d_out_p - d_out))).astype(jnp.bfloat16)
    b2p = jnp.pad(b2.reshape(1, -1), ((0, 0), (0, d_out_p - d_out))).astype(jnp.float32)
    return w1p, b1p, w2p, b2p, int(d_out)


@functools.partial(
    jax.jit,
    static_argnames=("d_out", "tm", "tn", "out_dtype", "approx_gelu",
                     "force_two_d"))
def mlp_pallas(x2d, w1p, b1p, w2p, b2p, *, d_out, tm=512, tn=512,
               out_dtype=jnp.float32, approx_gelu=False, force_two_d=False):
    """x2d: (M, D_in) f32 -> (M, d_out) out_dtype, with pre-padded params."""
    M, d_in = x2d.shape
    d_in_p, d_h_p = w1p.shape
    d_out_p = w2p.shape[1]

    vmem_limit = _vmem_limit_bytes()

    # Row tile: 16-aligned (bf16 packs 16 rows / vreg), MXU-filling default.
    tm_eff = min(tm, _round_up(M, 16))
    # v7x megacore: once the problem is big enough, force >= 2 row tiles so
    # the "parallel" row axis actually spans both TensorCores.
    if M >= 512:
        tm_eff = min(tm_eff, _round_up(-(-M // 2), 16))
    m_p = _round_up(M, tm_eff)

    # Pad rows to the tile and features to the pre-padded lane width; cast to
    # bf16 for the MXU.  Padded garbage rows are sliced off at the end.
    xp = jnp.pad(x2d, ((0, m_p - M), (0, d_in_p - d_in))).astype(jnp.bfloat16)

    # fc1 + GELU chunking over the hidden dim: bounds f32 temporaries to
    # (tm_eff, h_chunk) instead of (tm_eff, d_h_p).
    h_chunk = _largest_128_divisor(d_h_p, 512)
    n_chunks = d_h_p // h_chunk

    weight_bytes = (w1p.size + w2p.size) * 2 + (b1p.size + b2p.size) * 4
    one_d = (not force_two_d) and (weight_bytes <= vmem_limit // 3)

    if one_d:
        # 1-D grid over row tiles, full w2 resident (single-buffered):
        # no re-streaming of w2 per row tile, no g scratch.
        grid = (m_p // tm_eff,)
        kernel = functools.partial(_mlp_kernel_1d, h_chunk=h_chunk,
                                   n_chunks=n_chunks, approx_gelu=approx_gelu)
        out = pl.pallas_call(
            kernel,
            out_shape=jax.ShapeDtypeStruct((m_p, d_out_p), out_dtype),
            grid_spec=pltpu.PrefetchScalarGridSpec(
                num_scalar_prefetch=0,
                grid=grid,
                in_specs=[
                    pl.BlockSpec((tm_eff, d_in_p), lambda i: (i, 0)),
                    pl.BlockSpec((d_in_p, d_h_p), lambda i: (0, 0),
                                 pipeline_mode=pl.Buffered(1)),
                    pl.BlockSpec((1, d_h_p), lambda i: (0, 0),
                                 pipeline_mode=pl.Buffered(1)),
                    pl.BlockSpec((d_h_p, d_out_p), lambda i: (0, 0),
                                 pipeline_mode=pl.Buffered(1)),
                    pl.BlockSpec((1, d_out_p), lambda i: (0, 0),
                                 pipeline_mode=pl.Buffered(1)),
                ],
                out_specs=pl.BlockSpec((tm_eff, d_out_p), lambda i: (i, 0)),
                scratch_shapes=[pltpu.VMEM((tm_eff, d_out_p), jnp.float32)],
            ),
            compiler_params=pltpu.CompilerParams(
                dimension_semantics=("parallel",),
                vmem_limit_bytes=vmem_limit,
            ),
        )(xp, w1p, b1p, w2p, b2p)
    else:
        # 2-D grid: row tiles x lane-dense 128-aligned output stripes.
        # Stripe width is a divisor of the (128-padded) d_out — no dead
        # stripes.  The j (stripe) axis MUST stay "arbitrary": the g_ref
        # reuse via pl.when(j == 0) relies on in-order execution per core.
        tn_eff = _largest_128_divisor(d_out_p, min(tn, d_out_p))
        grid = (m_p // tm_eff, d_out_p // tn_eff)
        kernel = functools.partial(_mlp_kernel_2d, h_chunk=h_chunk,
                                   n_chunks=n_chunks, approx_gelu=approx_gelu)
        out = pl.pallas_call(
            kernel,
            out_shape=jax.ShapeDtypeStruct((m_p, d_out_p), out_dtype),
            grid_spec=pltpu.PrefetchScalarGridSpec(
                num_scalar_prefetch=0,
                grid=grid,
                in_specs=[
                    pl.BlockSpec((tm_eff, d_in_p), lambda i, j: (i, 0)),
                    pl.BlockSpec((d_in_p, d_h_p), lambda i, j: (0, 0),
                                 pipeline_mode=pl.Buffered(1)),
                    pl.BlockSpec((1, d_h_p), lambda i, j: (0, 0),
                                 pipeline_mode=pl.Buffered(1)),
                    pl.BlockSpec((d_h_p, tn_eff), lambda i, j: (0, j)),
                    pl.BlockSpec((1, tn_eff), lambda i, j: (0, j)),
                ],
                out_specs=pl.BlockSpec((tm_eff, tn_eff), lambda i, j: (i, j)),
                scratch_shapes=[pltpu.VMEM((tm_eff, d_h_p), jnp.bfloat16)],
            ),
            compiler_params=pltpu.CompilerParams(
                dimension_semantics=("parallel", "arbitrary"),
                vmem_limit_bytes=vmem_limit,
            ),
        )(xp, w1p, b1p, w2p, b2p)

    return out[:M, :d_out]


def mlp_forward(x, prepared, **kwargs):
    """x: (B, S, D_in) -> (B, S, d_out).  `prepared` from prepare_mlp_params."""
    w1p, b1p, w2p, b2p, d_out = prepared
    B, S, D = x.shape
    y2d = mlp_pallas(x.reshape(B * S, D), w1p, b1p, w2p, b2p, d_out=d_out,
                     **kwargs)
    return y2d.reshape(B, S, d_out)


def init_mlp_params(key, in_features, hidden_features, out_features):
    """Deterministic init mimicking nn.Linear's uniform(-1/sqrt(fan_in), +)."""
    k1, k2, k3, k4 = jax.random.split(key, 4)
    lim1 = 1.0 / jnp.sqrt(in_features)
    lim2 = 1.0 / jnp.sqrt(hidden_features)
    # Weights stored (in, out) — transposed vs. PyTorch's (out, in).
    w1 = jax.random.uniform(k1, (in_features, hidden_features), jnp.float32,
                            -lim1, lim1)
    b1 = jax.random.uniform(k2, (1, hidden_features), jnp.float32, -lim1, lim1)
    w2 = jax.random.uniform(k3, (hidden_features, out_features), jnp.float32,
                            -lim2, lim2)
    b2 = jax.random.uniform(k4, (1, out_features), jnp.float32, -lim2, lim2)
    return w1, b1, w2, b2


if __name__ == "__main__":
    # Small shapes consistent with the module: batch=2, seq=8,
    # in_features=32, hidden_features=64, out_features=32.
    B, S = 2, 8
    in_features, hidden_features, out_features = 32, 64, 32

    key = jax.random.PRNGKey(0)
    kx, kp = jax.random.split(key)
    x = jax.random.normal(kx, (B, S, in_features), jnp.float32)
    params = init_mlp_params(kp, in_features, hidden_features, out_features)
    prepared = prepare_mlp_params(*params)

    # Default path (weights fit in VMEM -> 1-D grid, fully resident w2).
    out = mlp_forward(x, prepared)
    jax.block_until_ready(out)
    # Also exercise the 2-D streamed-w2 path so both compile & run cleanly.
    out_2d = mlp_forward(x, prepared, force_two_d=True)
    jax.block_until_ready(out_2d)

    # Reference in plain f32 JAX (exact-erf GELU, dropout p=0 identity).
    # Kernel uses bf16 MXU operands with f32 accumulation, so tolerance is
    # loosened accordingly.
    w1, b1, w2, b2 = params
    h = x.reshape(B * S, in_features) @ w1 + b1
    g = 0.5 * h * (1.0 + lax.erf(h / jnp.sqrt(2.0)))
    ref = (g @ w2 + b2).reshape(B, S, out_features)

    assert out.shape == ref.shape and out_2d.shape == ref.shape
    assert jnp.allclose(out, ref, atol=2e-2, rtol=2e-2), (
        float(jnp.max(jnp.abs(out - ref))))
    assert jnp.allclose(out_2d, ref, atol=2e-2, rtol=2e-2), (
        float(jnp.max(jnp.abs(out_2d - ref))))

    print("KERNEL_OK")
</pallas_src>

<mosaic_0001>
module attributes {stable_mosaic.version = 11 : i64} {
  func.func @_mlp_kernel_1d(%arg0: i32, %arg1: memref<16x128xbf16, #tpu.memory_space<vmem>>, %arg2: memref<128x128xbf16, #tpu.memory_space<vmem>>, %arg3: memref<1x128xf32, #tpu.memory_space<vmem>>, %arg4: memref<128x128xbf16, #tpu.memory_space<vmem>>, %arg5: memref<1x128xf32, #tpu.memory_space<vmem>>, %arg6: memref<16x128xf32, #tpu.memory_space<vmem>>, %arg7: memref<16x128xf32, #tpu.memory_space<vmem>>) attributes {dimension_semantics = [#tpu.dimension_semantics<parallel>], iteration_bounds = array<i64: 1>, scalar_prefetch = 0 : i64, scratch_operands = 1 : i64, tpu.core_type = #tpu.core_type<tc>, window_params = [{transform_indices = @transform_0, window_bounds = array<i64: 16, 128>}, {pipeline_mode = #tpu.pipeline_mode<synchronous>, transform_indices = @transform_1, window_bounds = array<i64: 128, 128>}, {pipeline_mode = #tpu.pipeline_mode<synchronous>, transform_indices = @transform_2, window_bounds = array<i64: 1, 128>}, {pipeline_mode = #tpu.pipeline_mode<synchronous>, transform_indices = @transform_3, window_bounds = array<i64: 128, 128>}, {pipeline_mode = #tpu.pipeline_mode<synchronous>, transform_indices = @transform_4, window_bounds = array<i64: 1, 128>}, {transform_indices = @transform_5, window_bounds = array<i64: 16, 128>}]} {
    %c0 = arith.constant 0 : index
    %c0_0 = arith.constant 0 : index
    %0 = vector.load %arg5[%c0, %c0_0] : memref<1x128xf32, #tpu.memory_space<vmem>>, vector<1x128xf32>
    %1 = vector.shape_cast %0 : vector<1x128xf32> to vector<1x128xf32>
    %2 = vector.broadcast %1 : vector<1x128xf32> to vector<16x128xf32>
    %c0_1 = arith.constant 0 : index
    %c0_2 = arith.constant 0 : index
    %3 = vector.load %arg7[%c0_1, %c0_2] : memref<16x128xf32, #tpu.memory_space<vmem>>, vector<16x128xf32>
    tpu.vector_store %arg7[%c0_1, %c0_2], %2 {strides = array<i32>} : memref<16x128xf32, #tpu.memory_space<vmem>>, vector<16x128xf32>,
    %c0_i32 = arith.constant 0 : i32
    %c128_i32 = arith.constant 128 : i32
    %4 = arith.muli %c0_i32, %c128_i32 : i32
    %5 = tpu.assume_multiple %4, 128 : i32
    %c0_3 = arith.constant 0 : index
    %c0_4 = arith.constant 0 : index
    %6 = vector.load %arg1[%c0_3, %c0_4] : memref<16x128xbf16, #tpu.memory_space<vmem>>, vector<16x128xbf16>
    %c0_5 = arith.constant 0 : index
    %7 = arith.index_cast %5 : i32 to index
    %8 = vector.load %arg2[%c0_5, %7] : memref<128x128xbf16, #tpu.memory_space<vmem>>, vector<128x128xbf16>
    %cst = arith.constant dense<0.000000e+00> : vector<16x128xf32>
    %9 = tpu.matmul %6, %8, %cst {dimension_numbers = #tpu.dot_dimension_numbers<[1], [0], [0], [1], [0, 0, 1, 1], [], []>} : vector<16x128xbf16>, vector<128x128xbf16>, vector<16x128xf32> -> vector<16x128xf32>
    %c0_6 = arith.constant 0 : index
    %10 = arith.index_cast %5 : i32 to index
    %11 = vector.load %arg3[%c0_6, %10] : memref<1x128xf32, #tpu.memory_space<vmem>>, vector<1x128xf32>
    %12 = vector.broadcast %11 : vector<1x128xf32> to vector<16x128xf32>
    %13 = arith.addf %9, %12 : vector<16x128xf32>
    %cst_7 = arith.constant 5.000000e-01 : f32
    %14 = vector.broadcast %cst_7 : f32 to vector<16x128xf32>
    %15 = arith.mulf %14, %13 : vector<16x128xf32>
    %cst_8 = arith.constant 0.707106769 : f32
    %16 = vector.broadcast %cst_8 : f32 to vector<16x128xf32>
    %17 = arith.mulf %13, %16 : vector<16x128xf32>
    %18 = math.erf %17 : vector<16x128xf32>
    %cst_9 = arith.constant 1.000000e+00 : f32
    %19 = vector.broadcast %cst_9 : f32 to vector<16x128xf32>
    %20 = arith.addf %19, %18 : vector<16x128xf32>
    %21 = arith.mulf %15, %20 : vector<16x128xf32>
    %c0_10 = arith.constant 0 : index
    %c0_11 = arith.constant 0 : index
    %22 = vector.load %arg7[%c0_10, %c0_11] : memref<16x128xf32, #tpu.memory_space<vmem>>, vector<16x128xf32>
    %23 = arith.truncf %21 : vector<16x128xf32> to vector<16x128xbf16>
    %24 = arith.index_cast %5 : i32 to index
    %c0_12 = arith.constant 0 : index
    %25 = vector.load %arg4[%24, %c0_12] : memref<128x128xbf16, #tpu.memory_space<vmem>>, vector<128x128xbf16>
    %cst_13 = arith.constant dense<0.000000e+00> : vector<16x128xf32>
    %26 = tpu.matmul %23, %25, %cst_13 {dimension_numbers = #tpu.dot_dimension_numbers<[1], [0], [0], [1], [0, 0, 1, 1], [], []>} : vector<16x128xbf16>, vector<128x128xbf16>, vector<16x128xf32> -> vector<16x128xf32>
    %27 = arith.addf %22, %26 : vector<16x128xf32>
    %c0_14 = arith.constant 0 : index
    %c0_15 = arith.constant 0 : index
    %28 = vector.load %arg7[%c0_14, %c0_15] : memref<16x128xf32, #tpu.memory_space<vmem>>, vector<16x128xf32>
    tpu.vector_store %arg7[%c0_14, %c0_15], %27 {strides = array<i32>} : memref<16x128xf32, #tpu.memory_space<vmem>>, vector<16x128xf32>,
    %c1_i32 = arith.constant 1 : i32
    %c0_16 = arith.constant 0 : index
    %c0_17 = arith.constant 0 : index
    %29 = vector.load %arg7[%c0_16, %c0_17] : memref<16x128xf32, #tpu.memory_space<vmem>>, vector<16x128xf32>
    %c0_18 = arith.constant 0 : index
    %c0_19 = arith.constant 0 : index
    %30 = vector.load %arg6[%c0_18, %c0_19] : memref<16x128xf32, #tpu.memory_space<vmem>>, vector<16x128xf32>
    tpu.vector_store %arg6[%c0_18, %c0_19], %29 {strides = array<i32>} : memref<16x128xf32, #tpu.memory_space<vmem>>, vector<16x128xf32>,
    return
  }
  func.func @transform_0(%arg0: i32) -> (i32, i32) {
    %c0_i32 = arith.constant 0 : i32
    %c0_i32_0 = arith.constant 0 : i32
    return %arg0, %c0_i32 : i32, i32
  }
  func.func @transform_1(%arg0: i32) -> (i32, i32) {
    %c0_i32 = arith.constant 0 : i32
    %c0_i32_0 = arith.constant 0 : i32
    %c0_i32_1 = arith.constant 0 : i32
    return %c0_i32, %c0_i32_0 : i32, i32
  }
  func.func @transform_2(%arg0: i32) -> (i32, i32) {
    %c0_i32 = arith.constant 0 : i32
    %c0_i32_0 = arith.constant 0 : i32
    %c0_i32_1 = arith.constant 0 : i32
    return %c0_i32, %c0_i32_0 : i32, i32
  }
  func.func @transform_3(%arg0: i32) -> (i32, i32) {
    %c0_i32 = arith.constant 0 : i32
    %c0_i32_0 = arith.constant 0 : i32
    %c0_i32_1 = arith.constant 0 : i32
    return %c0_i32, %c0_i32_0 : i32, i32
  }
  func.func @transform_4(%arg0: i32) -> (i32, i32) {
    %c0_i32 = arith.constant 0 : i32
    %c0_i32_0 = arith.constant 0 : i32
    %c0_i32_1 = arith.constant 0 : i32
    return %c0_i32, %c0_i32_0 : i32, i32
  }
  func.func @transform_5(%arg0: i32) -> (i32, i32) {
    %c0_i32 = arith.constant 0 : i32
    %c0_i32_0 = arith.constant 0 : i32
    return %arg0, %c0_i32 : i32, i32
  }
}

</mosaic_0001>

<llo_original>
// kernel: mlp_pallas.1
$region0: #{mlp_pallas.1}
  #allocation0 [shape = 'u32[]', space=smem, size = 0x4, offset = 0x4, fixed_abs, tag = 'smem constant byte address 0x4 - core index']
  #allocation1 [shape = 'u32[144,128]{1,0:T(1,128)}', space=vmem, size = 0x12000, scoped, tag = 'internal scratch']
  #allocation2 [shape = 'f32[16,128]{1,0:T(8,128)}', space=vmem, size = 0x2000, scoped, tag = 'scratch operand']
  %s0 = inlined_call_operand.vmem [shape: bf16[16,128], index: 0, kind: input, shape index: {}]
  %s1 = inlined_call_operand.hbm [shape: bf16[128,128], index: 1, kind: input, shape index: {}]
  %s2 = inlined_call_operand.vmem [shape: f32[1,128], index: 2, kind: input, shape index: {}]
  %s3 = inlined_call_operand.hbm [shape: bf16[128,128], index: 3, kind: input, shape index: {}]
  %s4 = inlined_call_operand.vmem [shape: f32[1,128], index: 4, kind: input, shape index: {}]
  %s5 = inlined_call_operand.hbm [shape: f32[16,128], index: 5, kind: output, shape index: {}]
  %s6 = sld [smem:[#allocation0]]
  $region38: #{mlp_pallas.1} parent=0
    _
  %s8 = ssub.s32 1, %s6
  %s9 = scalar_select 0, %s8, %s6
  $region1: #{mlp_pallas.1} parent=0
    #allocation3 [shape = 'u8[32768]{0}', space=vmem, size = 0x8000, scoped, tag = 'input window, operand 1, single buffered']
    #allocation4 [shape = 's32[1]{0}', space=sflag, size = 0x4, scoped, tag = 'scoped memory for mlp_pallas.1']
    #allocation5 [shape = 's32[1]{0}', space=sflag, size = 0x4, scoped, tag = 'scoped memory for mlp_pallas.1']
    #allocation6 [shape = 'u8[32768]{0}', space=vmem, size = 0x8000, scoped, tag = 'input window, operand 3, single buffered']
    #allocation7 [shape = 's32[1]{0}', space=sflag, size = 0x4, scoped, tag = 'scoped memory for mlp_pallas.1']
    #allocation8 [shape = 'u8[8192]{0}', space=vmem, size = 0x2000, scoped, tag = 'output window, operand 0, single buffered']
    %10 = vsyncpa [#allocation4], 0
    %11 = vsyncpa [#allocation7], 0
    %12 = vsyncpa [#allocation5], 0
    // Predicated region
    $region2: #{mlp_pallas.1} parent=1 // pred_check
      _
    $region3: #{mlp_pallas.1} parent=1 // pred_check_branch
      %14 = sbr.rel (0) target = $region5
    $region4: #{mlp_pallas.1} parent=1 // pred_region
      _
    $region5: #{mlp_pallas.1} parent=1 // pred_fallthru
      _
    // Predicated region
    $region6: #{mlp_pallas.1} parent=1 // pred_check
      _
    $region7: #{mlp_pallas.1} parent=1 // pred_check_branch
      %16 = sbr.rel (0) target = $region9
    $region8: #{mlp_pallas.1} parent=1 // pred_region
      %s18 = ssub.s32 1024, 1024
      %19 = vsyncadd [#allocation4], %s18
      %s20 = sshll.u32 [#allocation3], 4
      %s21 = int_to_ptr.vmem [resolvable:$true] %s20
      %26 = dma.hbm_to_vmem [thread:$0]  %s1, 1024, %s21, [#allocation4], 64, 64, 4
    $region9: #{mlp_pallas.1} parent=1 // pred_fallthru
      _
    // Predicated region
    $region10: #{mlp_pallas.1} parent=1 // pred_check
      _
    $region11: #{mlp_pallas.1} parent=1 // pred_check_branch
      %28 = sbr.rel (0) target = $region13
    $region12: #{mlp_pallas.1} parent=1 // pred_region
      _
    $region13: #{mlp_pallas.1} parent=1 // pred_fallthru
      _
    // Predicated region
    $region14: #{mlp_pallas.1} parent=1 // pred_check
      _
    $region15: #{mlp_pallas.1} parent=1 // pred_check_branch
      %30 = sbr.rel (0) target = $region17
    $region16: #{mlp_pallas.1} parent=1 // pred_region
      %s32 = ssub.s32 1024, 1024
      %33 = vsyncadd [#allocation7], %s32
      %s34 = sshll.u32 [#allocation6], 4
      %s35 = int_to_ptr.vmem [resolvable:$true] %s34
      %40 = dma.hbm_to_vmem [thread:$0]  %s3, 1024, %s35, [#allocation7], 64, 64, 4
    $region17: #{mlp_pallas.1} parent=1 // pred_fallthru
      _
    // Predicated region
    $region18: #{mlp_pallas.1} parent=1 // pred_check
      _
    $region19: #{mlp_pallas.1} parent=1 // pred_check_branch
      %42 = sbr.rel (0) target = $region21
    $region20: #{mlp_pallas.1} parent=1 // pred_region
      _
    $region21: #{mlp_pallas.1} parent=1 // pred_fallthru
      _
    // Predicated region
    $region22: #{mlp_pallas.1} parent=1 // pred_check
      _
    $region23: #{mlp_pallas.1} parent=1 // pred_check_branch
      %44 = sbr.rel (0) target = $region25
    $region24: #{mlp_pallas.1} parent=1 // pred_region
      %45 = dma.done [#allocation4], 1024
    $region25: #{mlp_pallas.1} parent=1 // pred_fallthru
      _
    // Predicated region
    $region26: #{mlp_pallas.1} parent=1 // pred_check
      _
    $region27: #{mlp_pallas.1} parent=1 // pred_check_branch
      %47 = sbr.rel (0) target = $region29
    $region28: #{mlp_pallas.1} parent=1 // pred_region
      %48 = dma.done [#allocation7], 1024
    $region29: #{mlp_pallas.1} parent=1 // pred_fallthru
      _
    %v50 = vld [vmem:[%s4] sm:$0x1]
    %v52 = vlaneseq
    %v53 = vshrl.u32 %v52, 7
    %v54 = vsub.s32 0, %v53
    %v55 = vrot.slane %v50, %v54
    %57 = vst [vmem:[#allocation2] sm:$0xff] %v55
    %58 = vst [vmem:[#allocation2 + $0x8] sm:$0xff] %v55
    %v59 = vld [vmem:[%s0] sm:$0xf]
    %v60 = vld [vmem:[%s0 + $0x4] sm:$0xf]
    %v61 = vld [vmem:[#allocation3] sm:$0xf]
    %v62 = vld [vmem:[#allocation3 + $0x4] sm:$0xf]
    %v63 = vld [vmem:[#allocation3 + $0x8] sm:$0xf]
    %v64 = vld [vmem:[#allocation3 + $0xc] sm:$0xf]
    %v65 = vld [vmem:[#allocation3 + $0x10] sm:$0xf]
    %v66 = vld [vmem:[#allocation3 + $0x14] sm:$0xf]
    %v67 = vld [vmem:[#allocation3 + $0x18] sm:$0xf]
    %v68 = vld [vmem:[#allocation3 + $0x1c] sm:$0xf]
    %v69 = vld [vmem:[#allocation3 + $0x20] sm:$0xf]
    %v70 = vld [vmem:[#allocation3 + $0x24] sm:$0xf]
    %v71 = vld [vmem:[#allocation3 + $0x28] sm:$0xf]
    %v72 = vld [vmem:[#allocation3 + $0x2c] sm:$0xf]
    %v73 = vld [vmem:[#allocation3 + $0x30] sm:$0xf]
    %v74 = vld [vmem:[#allocation3 + $0x34] sm:$0xf]
    %v75 = vld [vmem:[#allocation3 + $0x38] sm:$0xf]
    %v76 = vld [vmem:[#allocation3 + $0x3c] sm:$0xf]
    %v77 = vld [vmem:[%s2] sm:$0x1]
    %v79 = vlaneseq
    %v80 = vshrl.u32 %v79, 7
    %v81 = vsub.s32 0, %v80
    %v82 = vrot.slane %v77, %v81
    %v86 = vunpack.c.l.b16 %v59
    %v87 = vunpack.c.l.b16 %v60
    %v88 = vpack.c.b16 %v87, %v86
    %v106 = vunpack.c.l.b16 %v61
    %v107 = vunpack.c.l.b16 %v62
    %v108 = vunpack.c.l.b16 %v63
    %v109 = vunpack.c.l.b16 %v64
    %v110 = vunpack.c.l.b16 %v65
    %v111 = vunpack.c.l.b16 %v66
    %v112 = vunpack.c.l.b16 %v67
    %v113 = vunpack.c.l.b16 %v68
    %v114 = vunpack.c.l.b16 %v69
    %v115 = vunpack.c.l.b16 %v70
    %v116 = vunpack.c.l.b16 %v71
    %v117 = vunpack.c.l.b16 %v72
    %v118 = vunpack.c.l.b16 %v73
    %v119 = vunpack.c.l.b16 %v74
    %v120 = vunpack.c.l.b16 %v75
    %v121 = vunpack.c.l.b16 %v76
    %v122 = vpack.c.b16 %v107, %v106
    %v123 = vpack.c.b16 %v109, %v108
    %v124 = vpack.c.b16 %v111, %v110
    %v125 = vpack.c.b16 %v113, %v112
    %v126 = vpack.c.b16 %v115, %v114
    %v127 = vpack.c.b16 %v117, %v116
    %v128 = vpack.c.b16 %v119, %v118
    %v129 = vpack.c.b16 %v121, %v120
    %138 = vmatprep.subr.bf16.mxu0 0
    %139 = vmatpush1.bf16.msra.mxu0 %v122
    %140 = vmatprep.subr.bf16.mxu0 0
    %141 = vmatpush1.bf16.msra.mxu0 %v123
    %142 = vmatprep.subr.bf16.mxu0 0
    %143 = vmatpush1.bf16.msra.mxu0 %v124
    %144 = vmatprep.subr.bf16.mxu0 0
    %145 = vmatpush1.bf16.msra.mxu0 %v125
    %146 = vmatprep.subr.bf16.mxu0 0
    %147 = vmatpush1.bf16.msra.mxu0 %v126
    %148 = vmatprep.subr.bf16.mxu0 0
    %149 = vmatpush1.bf16.msra.mxu0 %v127
    %150 = vmatprep.subr.bf16.mxu0 0
    %151 = vmatpush1.bf16.msra.mxu0 %v128
    %152 = vmatprep.subr.bf16.mxu0 0
    %153 = vmatpush1.bf16.msra.mxu0 %v129
    %154 = vmatprep.subr.bf16.mxu0 0
    %155 = vmatpush1.bf16.msra.mxu0 0
    %156 = vmatprep.subr.bf16.mxu0 0
    %157 = vmatpush1.bf16.msra.mxu0 0
    %158 = vmatprep.subr.bf16.mxu0 0
    %159 = vmatpush1.bf16.msra.mxu0 0
    %160 = vmatprep.subr.bf16.mxu0 0
    %161 = vmatpush1.bf16.msra.mxu0 0
    %162 = vmatprep.subr.bf16.mxu0 0
    %163 = vmatpush1.bf16.msra.mxu0 0
    %164 = vmatprep.subr.bf16.mxu0 0
    %165 = vmatpush1.bf16.msra.mxu0 0
    %166 = vmatprep.subr.bf16.mxu0 0
    %167 = vmatpush1.bf16.msra.mxu0 0
    %168 = vmatprep.subr.bf16.mxu0 0
    %169 = vmatpush1.bf16.msra.mxu0 0
    %170 = vmatprep.mubr.bf16.mxu0 0
    %171 = vmatmul.mubr.bf16.gmra.mrb[0].mxu0 %v88
    %v172 = vpop.f32.mrb[0].mxu0
    %v173 = vadd.f32 %v82, %v172
    %v174 = vpop.f32.mrb[0].mxu0
    %v175 = vpop.f32.mrb[0].mxu0
    %v176 = vadd.f32 %v82, %v175
    %v177 = vpop.f32.mrb[0].mxu0
    %178 = vdwg.mxu0
    %v179 = vmul.f32 %v173, 0.5
    %v180 = vmul.f32 %v176, 0.5
    %v181 = vmul.f32 %v173, 0.70710677
    %v182 = vmul.f32 %v176, 0.70710677
    %v183 = verf.f32.pop %v181
    %v184 = verf.f32.pop %v182
    %v185 = vadd.f32 %v183, 1.0
    %v186 = vadd.f32 %v184, 1.0
    %v187 = vmul.f32 %v179, %v185
    %v188 = vmul.f32 %v180, %v186
    %v189 = vld [vmem:[#allocation2] sm:$0xff]
    %v190 = vld [vmem:[#allocation2 + $0x8] sm:$0xff]
    %v191 = vpack.c.bf16 %v188, %v187
    %v192 = vld [vmem:[#allocation6] sm:$0xf]
    %v193 = vld [vmem:[#allocation6 + $0x4] sm:$0xf]
    %v194 = vld [vmem:[#allocation6 + $0x8] sm:$0xf]
    %v195 = vld [vmem:[#allocation6 + $0xc] sm:$0xf]
    %v196 = vld [vmem:[#allocation6 + $0x10] sm:$0xf]
    %v197 = vld [vmem:[#allocation6 + $0x14] sm:$0xf]
    %v198 = vld [vmem:[#allocation6 + $0x18] sm:$0xf]
    %v199 = vld [vmem:[#allocation6 + $0x1c] sm:$0xf]
    %v200 = vld [vmem:[#allocation6 + $0x20] sm:$0xf]
    %v201 = vld [vmem:[#allocation6 + $0x24] sm:$0xf]
    %v202 = vld [vmem:[#allocation6 + $0x28] sm:$0xf]
    %v203 = vld [vmem:[#allocation6 + $0x2c] sm:$0xf]
    %v204 = vld [vmem:[#allocation6 + $0x30] sm:$0xf]
    %v205 = vld [vmem:[#allocation6 + $0x34] sm:$0xf]
    %v206 = vld [vmem:[#allocation6 + $0x38] sm:$0xf]
    %v207 = vld [vmem:[#allocation6 + $0x3c] sm:$0xf]
    %v224 = vunpack.c.l.b16 %v192
    %v225 = vunpack.c.l.b16 %v193
    %v226 = vunpack.c.l.b16 %v194
    %v227 = vunpack.c.l.b16 %v195
    %v228 = vunpack.c.l.b16 %v196
    %v229 = vunpack.c.l.b16 %v197
    %v230 = vunpack.c.l.b16 %v198
    %v231 = vunpack.c.l.b16 %v199
    %v232 = vunpack.c.l.b16 %v200
    %v233 = vunpack.c.l.b16 %v201
    %v234 = vunpack.c.l.b16 %v202
    %v235 = vunpack.c.l.b16 %v203
    %v236 = vunpack.c.l.b16 %v204
    %v237 = vunpack.c.l.b16 %v205
    %v238 = vunpack.c.l.b16 %v206
    %v239 = vunpack.c.l.b16 %v207
    %v240 = vpack.c.b16 %v225, %v224
    %v241 = vpack.c.b16 %v227, %v226
    %v242 = vpack.c.b16 %v229, %v228
    %v243 = vpack.c.b16 %v231, %v230
    %v244 = vpack.c.b16 %v233, %v232
    %v245 = vpack.c.b16 %v235, %v234
    %v246 = vpack.c.b16 %v237, %v236
    %v247 = vpack.c.b16 %v239, %v238
    %256 = vmatprep.subr.bf16.mxu0 0
    %257 = vmatpush1.bf16.msra.mxu0 %v240
    %258 = vmatprep.subr.bf16.mxu0 0
    %259 = vmatpush1.bf16.msra.mxu0 %v241
    %260 = vmatprep.subr.bf16.mxu0 0
    %261 = vmatpush1.bf16.msra.mxu0 %v242
    %262 = vmatprep.subr.bf16.mxu0 0
    %263 = vmatpush1.bf16.msra.mxu0 %v243
    %264 = vmatprep.subr.bf16.mxu0 0
    %265 = vmatpush1.bf16.msra.mxu0 %v244
    %266 = vmatprep.subr.bf16.mxu0 0
    %267 = vmatpush1.bf16.msra.mxu0 %v245
    %268 = vmatprep.subr.bf16.mxu0 0
    %269 = vmatpush1.bf16.msra.mxu0 %v246
    %270 = vmatprep.subr.bf16.mxu0 0
    %271 = vmatpush1.bf16.msra.mxu0 %v247
    %272 = vmatprep.subr.bf16.mxu0 0
    %273 = vmatpush1.bf16.msra.mxu0 0
    %274 = vmatprep.subr.bf16.mxu0 0
    %275 = vmatpush1.bf16.msra.mxu0 0
    %276 = vmatprep.subr.bf16.mxu0 0
    %277 = vmatpush1.bf16.msra.mxu0 0
    %278 = vmatprep.subr.bf16.mxu0 0
    %279 = vmatpush1.bf16.msra.mxu0 0
    %280 = vmatprep.subr.bf16.mxu0 0
    %281 = vmatpush1.bf16.msra.mxu0 0
    %282 = vmatprep.subr.bf16.mxu0 0
    %283 = vmatpush1.bf16.msra.mxu0 0
    %284 = vmatprep.subr.bf16.mxu0 0
    %285 = vmatpush1.bf16.msra.mxu0 0
    %286 = vmatprep.subr.bf16.mxu0 0
    %287 = vmatpush1.bf16.msra.mxu0 0
    %288 = vmatprep.mubr.bf16.mxu0 0
    %289 = vmatmul.mubr.bf16.gmra.mrb[0].mxu0 %v191
    %v290 = vpop.f32.mrb[0].mxu0
    %v291 = vadd.f32 0.0, %v290
    %v292 = vpop.f32.mrb[0].mxu0
    %v293 = vpop.f32.mrb[0].mxu0
    %v294 = vadd.f32 0.0, %v293
    %v295 = vpop.f32.mrb[0].mxu0
    %296 = vdwg.mxu0
    %v297 = vadd.f32 %v189, %v291
    %v298 = vadd.f32 %v190, %v294
    %299 = vst [vmem:[#allocation2] sm:$0xff] %v297
    %300 = vst [vmem:[#allocation2 + $0x8] sm:$0xff] %v298
    %v301 = vld [vmem:[#allocation2] sm:$0xff]
    %v302 = vld [vmem:[#allocation2 + $0x8] sm:$0xff]
    %303 = vst [vmem:[#allocation8] sm:$0xff] %v301
    %304 = vst [vmem:[#allocation8 + $0x8] sm:$0xff] %v302
    // Predicated region
    $region30: #{mlp_pallas.1} parent=1 // pred_check
      _
    $region31: #{mlp_pallas.1} parent=1 // pred_check_branch
      %306 = sbr.rel (0) target = $region33
    $region32: #{mlp_pallas.1} parent=1 // pred_region
      %s308 = ssub.s32 256, 256
      %309 = vsyncadd [#allocation5], %s308
      %s310 = sshll.u32 [#allocation8], 4
      %s311 = int_to_ptr.vmem [resolvable:$true] %s310
      %316 = dma.vmem_to_hbm [thread:$0]  %s311, 256, %s5, [#allocation5], 128, 128, 8
    $region33: #{mlp_pallas.1} parent=1 // pred_fallthru
      _
    // Predicated region
    $region34: #{mlp_pallas.1} parent=1 // pred_check
      _
    $region35: #{mlp_pallas.1} parent=1 // pred_check_branch
      %318 = sbr.rel (0) target = $region37
    $region36: #{mlp_pallas.1} parent=1 // pred_region
      %319 = dma.done [#allocation5], 256
    $region37: #{mlp_pallas.1} parent=1 // pred_fallthru
      _
    %320 = vsyncpa [#allocation4], 1
    %321 = vsyncpa [#allocation7], 1
    %322 = vsyncpa [#allocation5], 1

</llo_original>
